<compile_context>
chip_gen: v5e
topology: v5e:2x2
jax: 0.10.0
libtpu: 0.0.40
codegen_flags: <defaults>
</compile_context>

<pallas_src>
from functools import partial

import jax
import jax.numpy as jnp
from jax import lax
from jax.experimental import pallas as pl
from jax.experimental.pallas import tpu as pltpu

LANE = 128      # lane width of a vreg
SUBLANE = 8     # sublane count of a vreg
OUT_PAD = 128   # lane-dense output slab; real outputs are columns 0..3


def _round_up(x, m):
    return (x + m - 1) // m * m


def actor_kernel(idx_ref, emb_ref, w1_ref, b1_ref, w2_ref, b2_ref,
                 wh_ref, bh_ref, o_ref):
    # idx_ref: [TB, 1] int32 node indices for this batch tile
    # emb_ref: [N_pad, F_pad] zero-padded embedding table (VMEM resident)
    # w1: [F_pad, E_pad]   b1: [1, E_pad]
    # w2: [E_pad, E_pad]   b2: [1, E_pad]
    # wh: [E_pad, OUT_PAD] fused (mean|std) head, zero beyond column 3
    # bh: [1, OUT_PAD]
    # o : [TB, OUT_PAD]
    tb = idx_ref.shape[0]
    n_pad = emb_ref.shape[0]

    # In-kernel row gather as a one-hot matmul on the MXU.
    idx = idx_ref[...]                                           # [TB, 1] int32
    iota = lax.broadcasted_iota(jnp.int32, (tb, n_pad), 1)       # [TB, N_pad]
    onehot = (iota == idx).astype(jnp.float32)                   # [TB, N_pad]
    x = jnp.dot(onehot, emb_ref[...],
                preferred_element_type=jnp.float32)              # [TB, F_pad]

    h1 = jnp.dot(x, w1_ref[...], preferred_element_type=jnp.float32) + b1_ref[...]
    h1 = jnp.maximum(h1, 0.0)                                    # relu
    h2 = jnp.dot(h1, w2_ref[...], preferred_element_type=jnp.float32) + b2_ref[...]
    h2 = jnp.maximum(h2, 0.0)                                    # relu
    heads = jnp.dot(h2, wh_ref[...], preferred_element_type=jnp.float32) + bh_ref[...]
    o_ref[...] = 10.0 * jnp.abs(heads)                           # 10 * cat(|mean|,|std|)


@jax.jit
def x_y_actor_forward(emb_node, node1, params):
    """emb_node: [1, N, F] float32; node1: [B] int indices; params from prepare_params()."""
    w1, b1 = params["w1"], params["b1"]
    w2, b2 = params["w2"], params["b2"]
    wh, bh = params["wh"], params["bh"]

    F_pad, E_pad = w1.shape

    # Zero-pad the embedding table to a lane-dense, MXU-friendly shape.
    table = emb_node[0].astype(jnp.float32)                      # [N, F]
    N, F = table.shape
    N_pad = _round_up(max(N, SUBLANE), LANE)
    table = jnp.pad(table, ((0, N_pad - N), (0, F_pad - F)))

    # Batch tiling: >= 8 rows per step, up to 128; pad B to a tile multiple.
    B = node1.shape[0]
    tile_b = min(128, _round_up(B, SUBLANE))
    B_pad = _round_up(B, tile_b)
    idx = jnp.pad(node1.astype(jnp.int32), (0, B_pad - B)).reshape(B_pad, 1)

    grid = (B_pad // tile_b,)

    def const2(shape):
        # full-array block, constant index_map -> loaded once, VMEM-resident.
        return pl.BlockSpec(shape, lambda i: (0, 0))

    out = pl.pallas_call(
        actor_kernel,
        out_shape=jax.ShapeDtypeStruct((B_pad, OUT_PAD), jnp.float32),
        grid=grid,
        in_specs=[
            pl.BlockSpec((tile_b, 1), lambda i: (i, 0)),         # node indices per tile
            const2((N_pad, F_pad)),                              # embedding table
            const2((F_pad, E_pad)), const2((1, E_pad)),          # layer1
            const2((E_pad, E_pad)), const2((1, E_pad)),          # layer2
            const2((E_pad, OUT_PAD)), const2((1, OUT_PAD)),      # fused heads
        ],
        out_specs=pl.BlockSpec((tile_b, OUT_PAD), lambda i: (i, 0)),
        compiler_params=pltpu.CompilerParams(
            dimension_semantics=("parallel",)),                  # megacore on v7x
    )(idx, table, w1, b1, w2, b2, wh, bh)

    # Slice the real batch rows and the 4 real output columns (padding is 0).
    return out[:B, :4]


def init_raw_params(key, node_in_features, emb_size):
    """Unpadded, PyTorch-equivalent parameters (weights stored as [in, out])."""
    ks = jax.random.split(key, 8)
    s = 0.1
    return {
        "w1": s * jax.random.normal(ks[0], (node_in_features, emb_size), jnp.float32),
        "b1": s * jax.random.normal(ks[1], (1, emb_size), jnp.float32),
        "w2": s * jax.random.normal(ks[2], (emb_size, emb_size), jnp.float32),
        "b2": s * jax.random.normal(ks[3], (1, emb_size), jnp.float32),
        "wm": s * jax.random.normal(ks[4], (emb_size, 2), jnp.float32),
        "bm": s * jax.random.normal(ks[5], (1, 2), jnp.float32),
        "ws": s * jax.random.normal(ks[6], (emb_size, 2), jnp.float32),
        "bs": s * jax.random.normal(ks[7], (1, 2), jnp.float32),
    }


def prepare_params(raw):
    """Done ONCE at init: fuse mean/std heads and zero-pad everything to lane-dense shapes."""
    F, E = raw["w1"].shape
    F_pad = _round_up(F, LANE)
    E_pad = _round_up(E, LANE)

    def pad2(a, rows, cols):
        return jnp.pad(a, ((0, rows - a.shape[0]), (0, cols - a.shape[1])))

    wh = jnp.concatenate([raw["wm"], raw["ws"]], axis=1)         # [E, 4]
    bh = jnp.concatenate([raw["bm"], raw["bs"]], axis=1)         # [1, 4]
    return {
        "w1": pad2(raw["w1"], F_pad, E_pad),
        "b1": pad2(raw["b1"], 1, E_pad),
        "w2": pad2(raw["w2"], E_pad, E_pad),
        "b2": pad2(raw["b2"], 1, E_pad),
        "wh": pad2(wh, E_pad, OUT_PAD),                          # zero beyond col 3
        "bh": pad2(bh, 1, OUT_PAD),
    }


def reference_forward(emb_node, node1, p):
    x = jnp.take(emb_node[0], node1, axis=0)
    x = jax.nn.relu(x @ p["w1"] + p["b1"])
    x = jax.nn.relu(x @ p["w2"] + p["b2"])
    mean = jnp.abs(x @ p["wm"] + p["bm"])
    std = jnp.abs(x @ p["ws"] + p["bs"])
    return 10.0 * jnp.concatenate([mean, std], axis=1)


if __name__ == "__main__":
    node_in_features = 32
    emb_size = 32
    num_nodes = 16
    batch = 8

    key = jax.random.PRNGKey(0)
    k_emb, k_idx, k_par = jax.random.split(key, 3)

    emb_node = jax.random.normal(k_emb, (1, num_nodes, node_in_features), jnp.float32)
    node1 = jax.random.randint(k_idx, (batch,), 0, num_nodes, dtype=jnp.int32)

    raw_params = init_raw_params(k_par, node_in_features, emb_size)
    params = prepare_params(raw_params)   # fuse heads + lane-dense padding, once

    y = x_y_actor_forward(emb_node, node1, params)
    y = jax.block_until_ready(y)

    y_ref = reference_forward(emb_node, node1, raw_params)
    assert y.shape == (batch, 4)
    assert jnp.allclose(y, y_ref, atol=1e-4, rtol=1e-4)

    print("KERNEL_OK")
</pallas_src>

<mosaic_0001>
module attributes {stable_mosaic.version = 11 : i64} {
  func.func @actor_kernel(%arg0: i32, %arg1: memref<8x1xi32, #tpu.memory_space<vmem>>, %arg2: memref<128x128xf32, #tpu.memory_space<vmem>>, %arg3: memref<128x128xf32, #tpu.memory_space<vmem>>, %arg4: memref<1x128xf32, #tpu.memory_space<vmem>>, %arg5: memref<128x128xf32, #tpu.memory_space<vmem>>, %arg6: memref<1x128xf32, #tpu.memory_space<vmem>>, %arg7: memref<128x128xf32, #tpu.memory_space<vmem>>, %arg8: memref<1x128xf32, #tpu.memory_space<vmem>>, %arg9: memref<8x128xf32, #tpu.memory_space<vmem>>) attributes {dimension_semantics = [#tpu.dimension_semantics<parallel>], iteration_bounds = array<i64: 1>, scalar_prefetch = 0 : i64, scratch_operands = 0 : i64, tpu.core_type = #tpu.core_type<tc>, window_params = [{transform_indices = @transform_0, window_bounds = array<i64: 8, 1>}, {pipeline_mode = #tpu.pipeline_mode<synchronous>, transform_indices = @transform_1, window_bounds = array<i64: 128, 128>}, {pipeline_mode = #tpu.pipeline_mode<synchronous>, transform_indices = @transform_2, window_bounds = array<i64: 128, 128>}, {pipeline_mode = #tpu.pipeline_mode<synchronous>, transform_indices = @transform_3, window_bounds = array<i64: 1, 128>}, {pipeline_mode = #tpu.pipeline_mode<synchronous>, transform_indices = @transform_4, window_bounds = array<i64: 128, 128>}, {pipeline_mode = #tpu.pipeline_mode<synchronous>, transform_indices = @transform_5, window_bounds = array<i64: 1, 128>}, {pipeline_mode = #tpu.pipeline_mode<synchronous>, transform_indices = @transform_6, window_bounds = array<i64: 128, 128>}, {pipeline_mode = #tpu.pipeline_mode<synchronous>, transform_indices = @transform_7, window_bounds = array<i64: 1, 128>}, {transform_indices = @transform_8, window_bounds = array<i64: 8, 128>}]} {
    %c0 = arith.constant 0 : index
    %c0_0 = arith.constant 0 : index
    %0 = vector.load %arg1[%c0, %c0_0] : memref<8x1xi32, #tpu.memory_space<vmem>>, vector<8x1xi32>
    %1 = tpu.iota {dimensions = array<i32: 1>} : vector<8x128xi32>
    %2 = vector.broadcast %0 : vector<8x1xi32> to vector<8x128xi32>
    %3 = arith.cmpi eq, %1, %2 : vector<8x128xi32>
    %4 = arith.extui %3 : vector<8x128xi1> to vector<8x128xi32>
    %5 = arith.sitofp %4 : vector<8x128xi32> to vector<8x128xf32>
    %c0_1 = arith.constant 0 : index
    %c0_2 = arith.constant 0 : index
    %6 = vector.load %arg2[%c0_1, %c0_2] : memref<128x128xf32, #tpu.memory_space<vmem>>, vector<128x128xf32>
    %cst = arith.constant dense<0.000000e+00> : vector<8x128xf32>
    %7 = tpu.matmul %5, %6, %cst {dimension_numbers = #tpu.dot_dimension_numbers<[1], [0], [0], [1], [0, 0, 1, 1], [], []>} : vector<8x128xf32>, vector<128x128xf32>, vector<8x128xf32> -> vector<8x128xf32>
    %c0_3 = arith.constant 0 : index
    %c0_4 = arith.constant 0 : index
    %8 = vector.load %arg3[%c0_3, %c0_4] : memref<128x128xf32, #tpu.memory_space<vmem>>, vector<128x128xf32>
    %cst_5 = arith.constant dense<0.000000e+00> : vector<8x128xf32>
    %9 = tpu.matmul %7, %8, %cst_5 {dimension_numbers = #tpu.dot_dimension_numbers<[1], [0], [0], [1], [0, 0, 1, 1], [], []>} : vector<8x128xf32>, vector<128x128xf32>, vector<8x128xf32> -> vector<8x128xf32>
    %c0_6 = arith.constant 0 : index
    %c0_7 = arith.constant 0 : index
    %10 = vector.load %arg4[%c0_6, %c0_7] : memref<1x128xf32, #tpu.memory_space<vmem>>, vector<1x128xf32>
    %11 = vector.broadcast %10 : vector<1x128xf32> to vector<8x128xf32>
    %12 = arith.addf %9, %11 : vector<8x128xf32>
    %cst_8 = arith.constant 0.000000e+00 : f32
    %13 = vector.broadcast %cst_8 : f32 to vector<8x128xf32>
    %14 = arith.maximumf %12, %13 : vector<8x128xf32>
    %c0_9 = arith.constant 0 : index
    %c0_10 = arith.constant 0 : index
    %15 = vector.load %arg5[%c0_9, %c0_10] : memref<128x128xf32, #tpu.memory_space<vmem>>, vector<128x128xf32>
    %cst_11 = arith.constant dense<0.000000e+00> : vector<8x128xf32>
    %16 = tpu.matmul %14, %15, %cst_11 {dimension_numbers = #tpu.dot_dimension_numbers<[1], [0], [0], [1], [0, 0, 1, 1], [], []>} : vector<8x128xf32>, vector<128x128xf32>, vector<8x128xf32> -> vector<8x128xf32>
    %c0_12 = arith.constant 0 : index
    %c0_13 = arith.constant 0 : index
    %17 = vector.load %arg6[%c0_12, %c0_13] : memref<1x128xf32, #tpu.memory_space<vmem>>, vector<1x128xf32>
    %18 = vector.broadcast %17 : vector<1x128xf32> to vector<8x128xf32>
    %19 = arith.addf %16, %18 : vector<8x128xf32>
    %cst_14 = arith.constant 0.000000e+00 : f32
    %20 = vector.broadcast %cst_14 : f32 to vector<8x128xf32>
    %21 = arith.maximumf %19, %20 : vector<8x128xf32>
    %c0_15 = arith.constant 0 : index
    %c0_16 = arith.constant 0 : index
    %22 = vector.load %arg7[%c0_15, %c0_16] : memref<128x128xf32, #tpu.memory_space<vmem>>, vector<128x128xf32>
    %cst_17 = arith.constant dense<0.000000e+00> : vector<8x128xf32>
    %23 = tpu.matmul %21, %22, %cst_17 {dimension_numbers = #tpu.dot_dimension_numbers<[1], [0], [0], [1], [0, 0, 1, 1], [], []>} : vector<8x128xf32>, vector<128x128xf32>, vector<8x128xf32> -> vector<8x128xf32>
    %c0_18 = arith.constant 0 : index
    %c0_19 = arith.constant 0 : index
    %24 = vector.load %arg8[%c0_18, %c0_19] : memref<1x128xf32, #tpu.memory_space<vmem>>, vector<1x128xf32>
    %25 = vector.broadcast %24 : vector<1x128xf32> to vector<8x128xf32>
    %26 = arith.addf %23, %25 : vector<8x128xf32>
    %27 = math.absf %26 : vector<8x128xf32>
    %cst_20 = arith.constant 1.000000e+01 : f32
    %28 = vector.broadcast %cst_20 : f32 to vector<8x128xf32>
    %29 = arith.mulf %28, %27 : vector<8x128xf32>
    %c0_21 = arith.constant 0 : index
    %c0_22 = arith.constant 0 : index
    %30 = vector.load %arg9[%c0_21, %c0_22] : memref<8x128xf32, #tpu.memory_space<vmem>>, vector<8x128xf32>
    tpu.vector_store %arg9[%c0_21, %c0_22], %29 {strides = array<i32>} : memref<8x128xf32, #tpu.memory_space<vmem>>, vector<8x128xf32>,
    return
  }
  func.func @transform_0(%arg0: i32) -> (i32, i32) {
    %c0_i32 = arith.constant 0 : i32
    %c0_i32_0 = arith.constant 0 : i32
    return %arg0, %c0_i32 : i32, i32
  }
  func.func @transform_1(%arg0: i32) -> (i32, i32) {
    %c0_i32 = arith.constant 0 : i32
    %c0_i32_0 = arith.constant 0 : i32
    %c0_i32_1 = arith.constant 0 : i32
    return %c0_i32, %c0_i32_0 : i32, i32
  }
  func.func @transform_2(%arg0: i32) -> (i32, i32) {
    %c0_i32 = arith.constant 0 : i32
    %c0_i32_0 = arith.constant 0 : i32
    %c0_i32_1 = arith.constant 0 : i32
    return %c0_i32, %c0_i32_0 : i32, i32
  }
  func.func @transform_3(%arg0: i32) -> (i32, i32) {
    %c0_i32 = arith.constant 0 : i32
    %c0_i32_0 = arith.constant 0 : i32
    %c0_i32_1 = arith.constant 0 : i32
    return %c0_i32, %c0_i32_0 : i32, i32
  }
  func.func @transform_4(%arg0: i32) -> (i32, i32) {
    %c0_i32 = arith.constant 0 : i32
    %c0_i32_0 = arith.constant 0 : i32
    %c0_i32_1 = arith.constant 0 : i32
    return %c0_i32, %c0_i32_0 : i32, i32
  }
  func.func @transform_5(%arg0: i32) -> (i32, i32) {
    %c0_i32 = arith.constant 0 : i32
    %c0_i32_0 = arith.constant 0 : i32
    %c0_i32_1 = arith.constant 0 : i32
    return %c0_i32, %c0_i32_0 : i32, i32
  }
  func.func @transform_6(%arg0: i32) -> (i32, i32) {
    %c0_i32 = arith.constant 0 : i32
    %c0_i32_0 = arith.constant 0 : i32
    %c0_i32_1 = arith.constant 0 : i32
    return %c0_i32, %c0_i32_0 : i32, i32
  }
  func.func @transform_7(%arg0: i32) -> (i32, i32) {
    %c0_i32 = arith.constant 0 : i32
    %c0_i32_0 = arith.constant 0 : i32
    %c0_i32_1 = arith.constant 0 : i32
    return %c0_i32, %c0_i32_0 : i32, i32
  }
  func.func @transform_8(%arg0: i32) -> (i32, i32) {
    %c0_i32 = arith.constant 0 : i32
    %c0_i32_0 = arith.constant 0 : i32
    return %arg0, %c0_i32 : i32, i32
  }
}

</mosaic_0001>

<llo_original>
// kernel: x_y_actor_forward.1
$region0: #{x_y_actor_forward.1}
  #allocation0 [shape = 'u32[]', space=smem, size = 0x4, offset = 0x4, fixed_abs, tag = 'smem constant byte address 0x4 - core index']
  #allocation1 [shape = 'u32[72,128]{1,0:T(1,128)}', space=vmem, size = 0x9000, scoped, tag = 'internal scratch']
  %s0 = inlined_call_operand.vmem [shape: s32[8,1], index: 0, kind: input, shape index: {}]
  %s1 = inlined_call_operand.vmem [shape: f32[128,128], index: 1, kind: input, shape index: {}]
  %s2 = inlined_call_operand.vmem [shape: f32[128,128], index: 2, kind: input, shape index: {}]
  %s3 = inlined_call_operand.vmem [shape: f32[1,128], index: 3, kind: input, shape index: {}]
  %s4 = inlined_call_operand.hbm [shape: f32[128,128], index: 4, kind: input, shape index: {}]
  %s5 = inlined_call_operand.vmem [shape: f32[1,128], index: 5, kind: input, shape index: {}]
  %s6 = inlined_call_operand.hbm [shape: f32[128,128], index: 6, kind: input, shape index: {}]
  %s7 = inlined_call_operand.vmem [shape: f32[1,128], index: 7, kind: input, shape index: {}]
  %s8 = inlined_call_operand.vmem [shape: f32[8,128], index: 8, kind: output, shape index: {}]
  %s9 = sld [smem:[#allocation0]]
  $region50: #{x_y_actor_forward.1} parent=0
    _
  %s11 = ssub.s32 1, %s9
  %s12 = scalar_select 0, %s11, %s9
  $region1: #{x_y_actor_forward.1} parent=0
    #allocation2 [shape = 'u8[65536]{0}', space=vmem, size = 0x10000, scoped, tag = 'input window, operand 4, single buffered']
    #allocation3 [shape = 's32[1]{0}', space=sflag, size = 0x4, scoped, tag = 'scoped memory for x_y_actor_forward.1']
    #allocation4 [shape = 'u8[65536]{0}', space=vmem, size = 0x10000, scoped, tag = 'input window, operand 6, single buffered']
    #allocation5 [shape = 's32[1]{0}', space=sflag, size = 0x4, scoped, tag = 'scoped memory for x_y_actor_forward.1']
    %13 = vsyncpa [#allocation3], 0
    %14 = vsyncpa [#allocation5], 0
    // Predicated region
    $region2: #{x_y_actor_forward.1} parent=1 // pred_check
      _
    $region3: #{x_y_actor_forward.1} parent=1 // pred_check_branch
      %16 = sbr.rel (0) target = $region5
    $region4: #{x_y_actor_forward.1} parent=1 // pred_region
      _
    $region5: #{x_y_actor_forward.1} parent=1 // pred_fallthru
      _
    // Predicated region
    $region6: #{x_y_actor_forward.1} parent=1 // pred_check
      _
    $region7: #{x_y_actor_forward.1} parent=1 // pred_check_branch
      %18 = sbr.rel (0) target = $region9
    $region8: #{x_y_actor_forward.1} parent=1 // pred_region
      _
    $region9: #{x_y_actor_forward.1} parent=1 // pred_fallthru
      _
    // Predicated region
    $region10: #{x_y_actor_forward.1} parent=1 // pred_check
      _
    $region11: #{x_y_actor_forward.1} parent=1 // pred_check_branch
      %20 = sbr.rel (0) target = $region13
    $region12: #{x_y_actor_forward.1} parent=1 // pred_region
      _
    $region13: #{x_y_actor_forward.1} parent=1 // pred_fallthru
      _
    // Predicated region
    $region14: #{x_y_actor_forward.1} parent=1 // pred_check
      _
    $region15: #{x_y_actor_forward.1} parent=1 // pred_check_branch
      %22 = sbr.rel (0) target = $region17
    $region16: #{x_y_actor_forward.1} parent=1 // pred_region
      _
    $region17: #{x_y_actor_forward.1} parent=1 // pred_fallthru
      _
    // Predicated region
    $region18: #{x_y_actor_forward.1} parent=1 // pred_check
      _
    $region19: #{x_y_actor_forward.1} parent=1 // pred_check_branch
      %24 = sbr.rel (0) target = $region21
    $region20: #{x_y_actor_forward.1} parent=1 // pred_region
      %26 = vsyncadd [#allocation3], 0
      %s27 = sshll.u32 %s4, 4
      %s28 = int_to_ptr.hbm [resolvable:$true] %s27
      %s29 = sshll.u32 [#allocation2], 4
      %s30 = int_to_ptr.vmem [resolvable:$true] %s29
      %35 = dma.hbm_to_vmem [thread:$0]  %s28, 2048, %s30, [#allocation3], 128, 128, 8
    $region21: #{x_y_actor_forward.1} parent=1 // pred_fallthru
      _
    // Predicated region
    $region22: #{x_y_actor_forward.1} parent=1 // pred_check
      _
    $region23: #{x_y_actor_forward.1} parent=1 // pred_check_branch
      %37 = sbr.rel (0) target = $region25
    $region24: #{x_y_actor_forward.1} parent=1 // pred_region
      _
    $region25: #{x_y_actor_forward.1} parent=1 // pred_fallthru
      _
    // Predicated region
    $region26: #{x_y_actor_forward.1} parent=1 // pred_check
      _
    $region27: #{x_y_actor_forward.1} parent=1 // pred_check_branch
      %39 = sbr.rel (0) target = $region29
    $region28: #{x_y_actor_forward.1} parent=1 // pred_region
      %41 = vsyncadd [#allocation5], 0
      %s42 = sshll.u32 %s6, 4
      %s43 = int_to_ptr.hbm [resolvable:$true] %s42
      %s44 = sshll.u32 [#allocation4], 4
      %s45 = int_to_ptr.vmem [resolvable:$true] %s44
      %50 = dma.hbm_to_vmem [thread:$0]  %s43, 2048, %s45, [#allocation5], 128, 128, 8
    $region29: #{x_y_actor_forward.1} parent=1 // pred_fallthru
      _
    // Predicated region
    $region30: #{x_y_actor_forward.1} parent=1 // pred_check
      _
    $region31: #{x_y_actor_forward.1} parent=1 // pred_check_branch
      %52 = sbr.rel (0) target = $region33
    $region32: #{x_y_actor_forward.1} parent=1 // pred_region
      _
    $region33: #{x_y_actor_forward.1} parent=1 // pred_fallthru
      _
    // Predicated region
    $region34: #{x_y_actor_forward.1} parent=1 // pred_check
      _
    $region35: #{x_y_actor_forward.1} parent=1 // pred_check_branch
      %54 = sbr.rel (0) target = $region37
    $region36: #{x_y_actor_forward.1} parent=1 // pred_region
      %56 = dma.done [#allocation3], 2048
    $region37: #{x_y_actor_forward.1} parent=1 // pred_fallthru
      _
    // Predicated region
    $region38: #{x_y_actor_forward.1} parent=1 // pred_check
      _
    $region39: #{x_y_actor_forward.1} parent=1 // pred_check_branch
      %58 = sbr.rel (0) target = $region41
    $region40: #{x_y_actor_forward.1} parent=1 // pred_region
      %60 = dma.done [#allocation5], 2048
    $region41: #{x_y_actor_forward.1} parent=1 // pred_fallthru
      _
    %v61 = vld [vmem:[%s0] sm:$0xff]
    %v62 = vlaneseq
    %v63 = vand.u32 %v62, 127
    %64 = vset.pattern.permute.xlu0 0
    %65 = vperm.xlu0 %64, %v61
    %v66 = vpop.permute.xlu0 %65
    %vm67 = vcmp.eq.s32.totalorder %v63, %v66
    %v68 = vsel %vm67, 1, 0
    %v69 = vcvt.s32.f32 %v68
    %v70 = vld [vmem:[%s1] sm:$0xff]
    %v71 = vld [vmem:[%s1 + $0x8] sm:$0xff]
    %v72 = vld [vmem:[%s1 + $0x10] sm:$0xff]
    %v73 = vld [vmem:[%s1 + $0x18] sm:$0xff]
    %v74 = vld [vmem:[%s1 + $0x20] sm:$0xff]
    %v75 = vld [vmem:[%s1 + $0x28] sm:$0xff]
    %v76 = vld [vmem:[%s1 + $0x30] sm:$0xff]
    %v77 = vld [vmem:[%s1 + $0x38] sm:$0xff]
    %v78 = vld [vmem:[%s1 + $0x40] sm:$0xff]
    %v79 = vld [vmem:[%s1 + $0x48] sm:$0xff]
    %v80 = vld [vmem:[%s1 + $0x50] sm:$0xff]
    %v81 = vld [vmem:[%s1 + $0x58] sm:$0xff]
    %v82 = vld [vmem:[%s1 + $0x60] sm:$0xff]
    %v83 = vld [vmem:[%s1 + $0x68] sm:$0xff]
    %v84 = vld [vmem:[%s1 + $0x70] sm:$0xff]
    %v85 = vld [vmem:[%s1 + $0x78] sm:$0xff]
    %86 = vmatpush.msra.mxu0 %v85
    %87 = vmatpush.msra.mxu0 %v84
    %88 = vmatpush.msra.mxu0 %v83
    %89 = vmatpush.msra.mxu0 %v82
    %90 = vmatpush.msra.mxu0 %v81
    %91 = vmatpush.msra.mxu0 %v80
    %92 = vmatpush.msra.mxu0 %v79
    %93 = vmatpush.msra.mxu0 %v78
    %94 = vmatpush.msra.mxu0 %v77
    %95 = vmatpush.msra.mxu0 %v76
    %96 = vmatpush.msra.mxu0 %v75
    %97 = vmatpush.msra.mxu0 %v74
    %98 = vmatpush.msra.mxu0 %v73
    %99 = vmatpush.msra.mxu0 %v72
    %100 = vmatpush.msra.mxu0 %v71
    %101 = vmatpush.msra.mxu0 %v70
    %102 = vmatmul.f32.gmra.mxu0 %v69
    %v103 = vpop.f32.mrf.mxu0
    %v104 = vadd.f32 0.0, %v103
    %105 = vdwg.mxu0
    %v106 = vld [vmem:[%s2] sm:$0xff]
    %v107 = vld [vmem:[%s2 + $0x8] sm:$0xff]
    %v108 = vld [vmem:[%s2 + $0x10] sm:$0xff]
    %v109 = vld [vmem:[%s2 + $0x18] sm:$0xff]
    %v110 = vld [vmem:[%s2 + $0x20] sm:$0xff]
    %v111 = vld [vmem:[%s2 + $0x28] sm:$0xff]
    %v112 = vld [vmem:[%s2 + $0x30] sm:$0xff]
    %v113 = vld [vmem:[%s2 + $0x38] sm:$0xff]
    %v114 = vld [vmem:[%s2 + $0x40] sm:$0xff]
    %v115 = vld [vmem:[%s2 + $0x48] sm:$0xff]
    %v116 = vld [vmem:[%s2 + $0x50] sm:$0xff]
    %v117 = vld [vmem:[%s2 + $0x58] sm:$0xff]
    %v118 = vld [vmem:[%s2 + $0x60] sm:$0xff]
    %v119 = vld [vmem:[%s2 + $0x68] sm:$0xff]
    %v120 = vld [vmem:[%s2 + $0x70] sm:$0xff]
    %v121 = vld [vmem:[%s2 + $0x78] sm:$0xff]
    %v122 = vld [vmem:[%s3] sm:$0x1]
    %v124 = vperm.slane %v122, 0
    %126 = vmatpush.msra.mxu0 %v121
    %127 = vmatpush.msra.mxu0 %v120
    %128 = vmatpush.msra.mxu0 %v119
    %129 = vmatpush.msra.mxu0 %v118
    %130 = vmatpush.msra.mxu0 %v117
    %131 = vmatpush.msra.mxu0 %v116
    %132 = vmatpush.msra.mxu0 %v115
    %133 = vmatpush.msra.mxu0 %v114
    %134 = vmatpush.msra.mxu0 %v113
    %135 = vmatpush.msra.mxu0 %v112
    %136 = vmatpush.msra.mxu0 %v111
    %137 = vmatpush.msra.mxu0 %v110
    %138 = vmatpush.msra.mxu0 %v109
    %139 = vmatpush.msra.mxu0 %v108
    %140 = vmatpush.msra.mxu0 %v107
    %141 = vmatpush.msra.mxu0 %v106
    %142 = vmatmul.f32.gmra.mxu0 %v104
    %v143 = vpop.f32.mrf.mxu0
    %v144 = vadd.f32 %v124, %v143
    %145 = vdwg.mxu0
    %v146 = vmax.f32 %v144, 0.0
    %v147 = vld [vmem:[#allocation2] sm:$0xff]
    %v148 = vld [vmem:[#allocation2 + $0x8] sm:$0xff]
    %v149 = vld [vmem:[#allocation2 + $0x10] sm:$0xff]
    %v150 = vld [vmem:[#allocation2 + $0x18] sm:$0xff]
    %v151 = vld [vmem:[#allocation2 + $0x20] sm:$0xff]
    %v152 = vld [vmem:[#allocation2 + $0x28] sm:$0xff]
    %v153 = vld [vmem:[#allocation2 + $0x30] sm:$0xff]
    %v154 = vld [vmem:[#allocation2 + $0x38] sm:$0xff]
    %v155 = vld [vmem:[#allocation2 + $0x40] sm:$0xff]
    %v156 = vld [vmem:[#allocation2 + $0x48] sm:$0xff]
    %v157 = vld [vmem:[#allocation2 + $0x50] sm:$0xff]
    %v158 = vld [vmem:[#allocation2 + $0x58] sm:$0xff]
    %v159 = vld [vmem:[#allocation2 + $0x60] sm:$0xff]
    %v160 = vld [vmem:[#allocation2 + $0x68] sm:$0xff]
    %v161 = vld [vmem:[#allocation2 + $0x70] sm:$0xff]
    %v162 = vld [vmem:[#allocation2 + $0x78] sm:$0xff]
    %v163 = vld [vmem:[%s5] sm:$0x1]
    %v165 = vperm.slane %v163, 0
    %167 = vmatpush.msra.mxu0 %v162
    %168 = vmatpush.msra.mxu0 %v161
    %169 = vmatpush.msra.mxu0 %v160
    %170 = vmatpush.msra.mxu0 %v159
    %171 = vmatpush.msra.mxu0 %v158
    %172 = vmatpush.msra.mxu0 %v157
    %173 = vmatpush.msra.mxu0 %v156
    %174 = vmatpush.msra.mxu0 %v155
    %175 = vmatpush.msra.mxu0 %v154
    %176 = vmatpush.msra.mxu0 %v153
    %177 = vmatpush.msra.mxu0 %v152
    %178 = vmatpush.msra.mxu0 %v151
    %179 = vmatpush.msra.mxu0 %v150
    %180 = vmatpush.msra.mxu0 %v149
    %181 = vmatpush.msra.mxu0 %v148
    %182 = vmatpush.msra.mxu0 %v147
    %183 = vmatmul.f32.gmra.mxu0 %v146
    %v184 = vpop.f32.mrf.mxu0
    %v185 = vadd.f32 %v165, %v184
    %186 = vdwg.mxu0
    %v187 = vmax.f32 %v185, 0.0
    %v188 = vld [vmem:[#allocation4] sm:$0xff]
    %v189 = vld [vmem:[#allocation4 + $0x8] sm:$0xff]
    %v190 = vld [vmem:[#allocation4 + $0x10] sm:$0xff]
    %v191 = vld [vmem:[#allocation4 + $0x18] sm:$0xff]
    %v192 = vld [vmem:[#allocation4 + $0x20] sm:$0xff]
    %v193 = vld [vmem:[#allocation4 + $0x28] sm:$0xff]
    %v194 = vld [vmem:[#allocation4 + $0x30] sm:$0xff]
    %v195 = vld [vmem:[#allocation4 + $0x38] sm:$0xff]
    %v196 = vld [vmem:[#allocation4 + $0x40] sm:$0xff]
    %v197 = vld [vmem:[#allocation4 + $0x48] sm:$0xff]
    %v198 = vld [vmem:[#allocation4 + $0x50] sm:$0xff]
    %v199 = vld [vmem:[#allocation4 + $0x58] sm:$0xff]
    %v200 = vld [vmem:[#allocation4 + $0x60] sm:$0xff]
    %v201 = vld [vmem:[#allocation4 + $0x68] sm:$0xff]
    %v202 = vld [vmem:[#allocation4 + $0x70] sm:$0xff]
    %v203 = vld [vmem:[#allocation4 + $0x78] sm:$0xff]
    %v204 = vld [vmem:[%s7] sm:$0x1]
    %v206 = vperm.slane %v204, 0
    %208 = vmatpush.msra.mxu0 %v203
    %209 = vmatpush.msra.mxu0 %v202
    %210 = vmatpush.msra.mxu0 %v201
    %211 = vmatpush.msra.mxu0 %v200
    %212 = vmatpush.msra.mxu0 %v199
    %213 = vmatpush.msra.mxu0 %v198
    %214 = vmatpush.msra.mxu0 %v197
    %215 = vmatpush.msra.mxu0 %v196
    %216 = vmatpush.msra.mxu0 %v195
    %217 = vmatpush.msra.mxu0 %v194
    %218 = vmatpush.msra.mxu0 %v193
    %219 = vmatpush.msra.mxu0 %v192
    %220 = vmatpush.msra.mxu0 %v191
    %221 = vmatpush.msra.mxu0 %v190
    %222 = vmatpush.msra.mxu0 %v189
    %223 = vmatpush.msra.mxu0 %v188
    %224 = vmatmul.f32.gmra.mxu0 %v187
    %v225 = vpop.f32.mrf.mxu0
    %v226 = vadd.f32 %v206, %v225
    %227 = vdwg.mxu0
    %v228 = vand.u32 2147483647, %v226
    %v229 = vmul.f32 %v228, 10.0
    %230 = vst [vmem:[%s8] sm:$0xff] %v229
    // Predicated region
    $region42: #{x_y_actor_forward.1} parent=1 // pred_check
      _
    $region43: #{x_y_actor_forward.1} parent=1 // pred_check_branch
      %232 = sbr.rel (0) target = $region45
    $region44: #{x_y_actor_forward.1} parent=1 // pred_region
      _
    $region45: #{x_y_actor_forward.1} parent=1 // pred_fallthru
      _
    // Predicated region
    $region46: #{x_y_actor_forward.1} parent=1 // pred_check
      _
    $region47: #{x_y_actor_forward.1} parent=1 // pred_check_branch
      %234 = sbr.rel (0) target = $region49
    $region48: #{x_y_actor_forward.1} parent=1 // pred_region
      _
    $region49: #{x_y_actor_forward.1} parent=1 // pred_fallthru
      _
    %235 = vsyncpa [#allocation3], 1
    %236 = vsyncpa [#allocation5], 1

</llo_original>
